<compile_context>
chip_gen: v5e
topology: v5e:2x2
jax: 0.10.0
libtpu: 0.0.40
codegen_flags: <defaults>
</compile_context>

<pallas_src>
from functools import partial

import jax
import jax.numpy as jnp
import numpy as np
from jax.experimental import pallas as pl
from jax.experimental.pallas import tpu as pltpu


def _hybrid_attention_kernel(approx_recip,
                             w_in_t_ref,     # (D, D)     linear_in.weight^T
                             w_out_t_ref,    # (4D, D)    linear_out.weight^T
                             in_tree_ref,    # (B, D)     f32
                             in_txt_ref,     # (B, D)     f32
                             ctxf_tree_ref,  # (B*Lt, D)  flattened context_tree
                             bias_tree_ref,  # (B, B*Lt)  f32 additive {0, -inf}
                             ctxf_txt_ref,   # (B*Lx, D)  flattened context_txt
                             bias_txt_ref,   # (B, B*Lx)  f32 additive {0, -inf}
                             out_ref):       # (B, PW)    packed f32 output slab
    B, D = in_tree_ref.shape
    nt = bias_tree_ref.shape[1]              # B * Lt
    nx = bias_txt_ref.shape[1]               # B * Lx
    mx_dtype = w_in_t_ref.dtype              # MXU operand dtype (bf16 or f32)

    in_tree = in_tree_ref[...]
    in_txt = in_txt_ref[...]

    # Both linear_in projections as ONE MXU matmul (2B rows -> full sublanes).
    in_both = jnp.concatenate([in_tree, in_txt], axis=0)               # (2B, D)
    tt_both = jnp.dot(in_both.astype(mx_dtype), w_in_t_ref[...],
                      preferred_element_type=jnp.float32)              # (2B, D) f32

    def attend(tt, ctxf_ref, bias_ref):
        ctxf = ctxf_ref[...]                                            # (B*L, D)
        # Scores for all B queries against all B*L context rows in one dense
        # MXU pass with a lane-dense (B, B*L) result (instead of B q=1 bmm's).
        # dot_general contracts dim 1 of both operands -> no VMEM transpose.
        s = jax.lax.dot_general(
            tt.astype(ctxf.dtype), ctxf,
            dimension_numbers=(((1,), (1,)), ((), ())),
            preferred_element_type=jnp.float32)                         # (B, B*L)
        # bias is 0 at own-block unmasked positions and -inf at off-block and
        # masked_fill positions, so one softmax over the whole lane axis is
        # exactly the per-example length-L masked softmax; off-block weights
        # come out as exact zeros (block-diagonal attention matrix).
        s = s + bias_ref[...]
        m = jnp.max(s, axis=-1, keepdims=True)
        e = jnp.exp(s - m)
        denom = jnp.sum(e, axis=-1, keepdims=True)
        attn_bd = e * pl.reciprocal(denom, approx=approx_recip)         # (B, B*L)
        # weightedContext: ONE (B, B*L) @ (B*L, D) MXU matmul (K = B*L).
        wc = jnp.dot(attn_bd.astype(ctxf.dtype), ctxf,
                     preferred_element_type=jnp.float32)                # (B, D)
        return attn_bd, wc

    attn_tree_bd, wc_tree = attend(tt_both[0:B, :], ctxf_tree_ref, bias_tree_ref)
    attn_txt_bd, wc_txt = attend(tt_both[B:2 * B, :], ctxf_txt_ref, bias_txt_ref)

    # contextCombined built in registers (no VMEM scratch round-trip), then a
    # single K = 4D MXU contraction and tanh.
    cc = jnp.concatenate([wc_tree, in_tree, wc_txt, in_txt], axis=-1)   # (B, 4D)
    ctx_out = jnp.tanh(jnp.dot(cc.astype(mx_dtype), w_out_t_ref[...],
                               preferred_element_type=jnp.float32))     # (B, D)

    # Single lane-dense packed store:
    #   [contextOutput | attn_tree (block-diag) | attn_txt (block-diag) | 0 pad]
    pad = out_ref.shape[1] - (D + nt + nx)
    pieces = [ctx_out, attn_tree_bd, attn_txt_bd]
    if pad:
        pieces.append(jnp.zeros((B, pad), jnp.float32))
    out_ref[...] = jnp.concatenate(pieces, axis=-1)


def prepare_params(w_in, w_out, param_dtype=jnp.float32):
    """One-time parameter prep, hoisted out of the per-forward path:
    pre-transpose so the kernel never transposes on the XLU, optionally
    downcast to bf16 for MXU-native matmuls (f32 accumulation in-kernel)."""
    return (jnp.transpose(w_in).astype(param_dtype),      # (D, D)
            jnp.transpose(w_out).astype(param_dtype))     # (4D, D)


@partial(jax.jit, static_argnames=("approx_reciprocal",))
def hybrid_attention(w_in_t, w_out_t, inputs_tree, context_tree, mask_tree,
                     inputs_txt, context_txt, mask_txt, *,
                     approx_reciprocal=True):
    B, D = inputs_tree.shape
    Lt = context_tree.shape[1]
    Lx = context_txt.shape[1]
    nt, nx = B * Lt, B * Lx
    packed_w = pl.cdiv(D + nt + nx, 128) * 128            # lane-dense slab width

    def block_bias(mask, L):
        # bias[b, b'*L + l] = 0 if (b' == b and mask[b, l] == 0) else -inf
        own = (jnp.arange(B * L, dtype=jnp.int32)[None, :] // L
               == jnp.arange(B, dtype=jnp.int32)[:, None])             # (B, B*L)
        unmasked = jnp.tile(mask == 0, (1, B))                          # (B, B*L)
        return jnp.where(own & unmasked, 0.0, -jnp.inf).astype(jnp.float32)

    bias_tree = block_bias(mask_tree, Lt)
    bias_txt = block_bias(mask_txt, Lx)
    ctxf_tree = context_tree.reshape(nt, D)
    ctxf_txt = context_txt.reshape(nx, D)

    packed = pl.pallas_call(
        partial(_hybrid_attention_kernel, approx_reciprocal),
        out_shape=jax.ShapeDtypeStruct((B, packed_w), jnp.float32),
        in_specs=[pl.BlockSpec(memory_space=pltpu.MemorySpace.VMEM)
                  for _ in range(8)],
        out_specs=pl.BlockSpec(memory_space=pltpu.MemorySpace.VMEM),
    )(w_in_t, w_out_t, inputs_tree, inputs_txt,
      ctxf_tree, bias_tree, ctxf_txt, bias_txt)

    context_output = packed[:, :D]
    # Off-block entries of the block-diagonal attention slabs are exact zeros,
    # so the per-example attention rows are recovered by an exact sum-fold.
    attn_tree = packed[:, D:D + nt].reshape(B, B, Lt).sum(axis=1)
    attn_txt = packed[:, D + nt:D + nt + nx].reshape(B, B, Lx).sum(axis=1)
    return context_output, attn_tree, attn_txt


def reference(w_in, w_out, it, ct, mt, ix, cx, mx, operand_dtype=jnp.float32):
    """Pure-JAX reference mirroring the PyTorch forward (masked-softmax path).
    `operand_dtype` mirrors the kernel's matmul-operand precision (bf16 in the
    production config); accumulation and softmax math stay in float32."""
    dt = operand_dtype
    f32 = jnp.float32
    w_in_c, w_out_c = w_in.astype(dt), w_out.astype(dt)

    def stream(inp, ctx, mask):
        ctx_c = ctx.astype(dt)
        tt = jnp.einsum('bd,ed->be', inp.astype(dt), w_in_c,
                        preferred_element_type=f32)                  # linear_in
        s = jnp.einsum('bld,bd->bl', ctx_c, tt.astype(dt),
                       preferred_element_type=f32)
        s = jnp.where(mask != 0, -jnp.inf, s)                        # masked_fill
        m = jnp.max(s, axis=-1, keepdims=True)
        e = jnp.exp(s - m)
        attn = e / jnp.sum(e, axis=-1, keepdims=True)                # softmax
        wc = jnp.einsum('bl,bld->bd', attn.astype(dt), ctx_c,
                        preferred_element_type=f32)
        return attn, wc

    at, wct = stream(it, ct, mt)
    ax, wcx = stream(ix, cx, mx)
    cc = jnp.concatenate([wct, it, wcx, ix], axis=1).astype(dt)
    out = jnp.tanh(jnp.einsum('bk,dk->bd', cc, w_out_c,
                              preferred_element_type=f32))           # linear_out
    return out, at, ax


if __name__ == "__main__":
    # B=8 fills the vreg sublanes; 4D = 128 is one native MXU contraction;
    # D + B*Lt + B*Lx = 256 packs into an exactly lane-dense output slab.
    B, D, Lt, Lx = 8, 32, 16, 12
    key = jax.random.PRNGKey(0)
    k = jax.random.split(key, 6)

    bound_in = 1.0 / np.sqrt(D)
    bound_out = 1.0 / np.sqrt(4 * D)
    w_in = jax.random.uniform(k[0], (D, D), jnp.float32, -bound_in, bound_in)
    w_out = jax.random.uniform(k[1], (D, 4 * D), jnp.float32, -bound_out, bound_out)

    inputs_tree = jax.random.normal(k[2], (B, D), jnp.float32)
    context_tree = jax.random.normal(k[3], (B, Lt, D), jnp.float32)
    inputs_txt = jax.random.normal(k[4], (B, D), jnp.float32)
    context_txt = jax.random.normal(k[5], (B, Lx, D), jnp.float32)

    # Deterministic padding-style masks (nonzero == masked); every row keeps at
    # least one valid position (a fully-masked row is NaN in PyTorch as well).
    mask_tree = (jnp.arange(Lt)[None, :] >=
                 (Lt - jnp.arange(B)[:, None] - 1)).astype(jnp.float32)
    mask_txt = (jnp.arange(Lx)[None, :] >=
                (Lx - jnp.arange(B)[:, None] - 1)).astype(jnp.float32)

    # Production layout per review: weights + contexts in bf16 (MXU-native,
    # f32 accumulation); inputs, masks, softmax math and outputs stay f32.
    # (Pass param_dtype=jnp.float32 / f32 contexts for the module's native-
    #  precision path; the kernel is dtype-agnostic.)
    w_in_t, w_out_t = prepare_params(w_in, w_out, param_dtype=jnp.bfloat16)
    ctx_tree_b = context_tree.astype(jnp.bfloat16)
    ctx_txt_b = context_txt.astype(jnp.bfloat16)

    # Reference mirrors the kernel's matmul-operand precision so the structural
    # check stays tight (only f32 accumulation-order / transcendental noise).
    ref_out, ref_at, ref_ax = reference(
        w_in, w_out, inputs_tree, context_tree, mask_tree,
        inputs_txt, context_txt, mask_txt, operand_dtype=jnp.bfloat16)

    # 1) Exact-reciprocal run: tight structural / semantics check.
    out, at, ax = jax.block_until_ready(hybrid_attention(
        w_in_t, w_out_t, inputs_tree, ctx_tree_b, mask_tree,
        inputs_txt, ctx_txt_b, mask_txt, approx_reciprocal=False))
    np.testing.assert_allclose(np.asarray(out), np.asarray(ref_out),
                               atol=5e-3, rtol=5e-3)
    np.testing.assert_allclose(np.asarray(at), np.asarray(ref_at),
                               atol=5e-3, rtol=5e-3)
    np.testing.assert_allclose(np.asarray(ax), np.asarray(ref_ax),
                               atol=5e-3, rtol=5e-3)

    # 2) Production config: EUP approximate reciprocal (looser tolerance to
    #    absorb the vrcp approximation error).
    out2, at2, ax2 = jax.block_until_ready(hybrid_attention(
        w_in_t, w_out_t, inputs_tree, ctx_tree_b, mask_tree,
        inputs_txt, ctx_txt_b, mask_txt, approx_reciprocal=True))
    np.testing.assert_allclose(np.asarray(out2), np.asarray(ref_out),
                               atol=5e-2, rtol=5e-2)
    np.testing.assert_allclose(np.asarray(at2), np.asarray(ref_at),
                               atol=5e-2, rtol=5e-2)
    np.testing.assert_allclose(np.asarray(ax2), np.asarray(ref_ax),
                               atol=5e-2, rtol=5e-2)

    print("KERNEL_OK")
</pallas_src>

<mosaic_0001>
module attributes {stable_mosaic.version = 11 : i64} {
  func.func @_hybrid_attention_kernel(%arg0: memref<32x32xbf16, #tpu.memory_space<vmem>>, %arg1: memref<128x32xbf16, #tpu.memory_space<vmem>>, %arg2: memref<8x32xf32, #tpu.memory_space<vmem>>, %arg3: memref<8x32xf32, #tpu.memory_space<vmem>>, %arg4: memref<128x32xbf16, #tpu.memory_space<vmem>>, %arg5: memref<8x128xf32, #tpu.memory_space<vmem>>, %arg6: memref<96x32xbf16, #tpu.memory_space<vmem>>, %arg7: memref<8x96xf32, #tpu.memory_space<vmem>>, %arg8: memref<8x256xf32, #tpu.memory_space<vmem>>) attributes {dimension_semantics = [], scalar_prefetch = 0 : i64, scratch_operands = 0 : i64, tpu.core_type = #tpu.core_type<tc>} {
    %c0 = arith.constant 0 : index
    %c0_0 = arith.constant 0 : index
    %0 = vector.load %arg2[%c0, %c0_0] : memref<8x32xf32, #tpu.memory_space<vmem>>, vector<8x32xf32>
    %c0_1 = arith.constant 0 : index
    %c0_2 = arith.constant 0 : index
    %1 = vector.load %arg3[%c0_1, %c0_2] : memref<8x32xf32, #tpu.memory_space<vmem>>, vector<8x32xf32>
    %2 = tpu.concatenate %0, %1 in 0 : vector<8x32xf32>, vector<8x32xf32> -> vector<16x32xf32>
    %3 = arith.truncf %2 : vector<16x32xf32> to vector<16x32xbf16>
    %c0_3 = arith.constant 0 : index
    %c0_4 = arith.constant 0 : index
    %4 = vector.load %arg0[%c0_3, %c0_4] : memref<32x32xbf16, #tpu.memory_space<vmem>>, vector<32x32xbf16>
    %cst = arith.constant dense<0.000000e+00> : vector<16x32xf32>
    %5 = tpu.matmul %3, %4, %cst {dimension_numbers = #tpu.dot_dimension_numbers<[1], [0], [0], [1], [0, 0, 1, 1], [], []>} : vector<16x32xbf16>, vector<32x32xbf16>, vector<16x32xf32> -> vector<16x32xf32>
    %6 = vector.extract_strided_slice %5 {offsets = [0, 0], sizes = [8, 32], strides = [1, 1]} : vector<16x32xf32> to vector<8x32xf32>
    %c0_5 = arith.constant 0 : index
    %c0_6 = arith.constant 0 : index
    %7 = vector.load %arg4[%c0_5, %c0_6] : memref<128x32xbf16, #tpu.memory_space<vmem>>, vector<128x32xbf16>
    %8 = arith.truncf %6 : vector<8x32xf32> to vector<8x32xbf16>
    %cst_7 = arith.constant dense<0.000000e+00> : vector<8x128xf32>
    %9 = tpu.matmul %8, %7, %cst_7 {dimension_numbers = #tpu.dot_dimension_numbers<[1], [1], [0], [0], [0, 0, 1, 0], [], []>} : vector<8x32xbf16>, vector<128x32xbf16>, vector<8x128xf32> -> vector<8x128xf32>
    %c0_8 = arith.constant 0 : index
    %c0_9 = arith.constant 0 : index
    %10 = vector.load %arg5[%c0_8, %c0_9] : memref<8x128xf32, #tpu.memory_space<vmem>>, vector<8x128xf32>
    %11 = arith.addf %9, %10 : vector<8x128xf32>
    %cst_10 = arith.constant dense<0xFF800000> : vector<8xf32>
    %12 = vector.multi_reduction <maximumf>, %11, %cst_10 [1] : vector<8x128xf32> to vector<8xf32>
    %13 = vector.shape_cast %12 : vector<8xf32> to vector<8x1xf32>
    %14 = vector.broadcast %13 : vector<8x1xf32> to vector<8x128xf32>
    %15 = arith.subf %11, %14 : vector<8x128xf32>
    %16 = math.exp %15 : vector<8x128xf32>
    %cst_11 = arith.constant dense<0.000000e+00> : vector<8xf32>
    %17 = vector.multi_reduction <add>, %16, %cst_11 [1] : vector<8x128xf32> to vector<8xf32>
    %18 = vector.shape_cast %17 : vector<8xf32> to vector<8x1xf32>
    %19 = tpu.reciprocal %18 : vector<8x1xf32> -> vector<8x1xf32>
    %20 = vector.broadcast %19 : vector<8x1xf32> to vector<8x128xf32>
    %21 = arith.mulf %16, %20 : vector<8x128xf32>
    %22 = arith.truncf %21 : vector<8x128xf32> to vector<8x128xbf16>
    %cst_12 = arith.constant dense<0.000000e+00> : vector<8x32xf32>
    %23 = tpu.matmul %22, %7, %cst_12 {dimension_numbers = #tpu.dot_dimension_numbers<[1], [0], [0], [1], [0, 0, 1, 1], [], []>} : vector<8x128xbf16>, vector<128x32xbf16>, vector<8x32xf32> -> vector<8x32xf32>
    %24 = vector.extract_strided_slice %5 {offsets = [8, 0], sizes = [8, 32], strides = [1, 1]} : vector<16x32xf32> to vector<8x32xf32>
    %c0_13 = arith.constant 0 : index
    %c0_14 = arith.constant 0 : index
    %25 = vector.load %arg6[%c0_13, %c0_14] : memref<96x32xbf16, #tpu.memory_space<vmem>>, vector<96x32xbf16>
    %26 = arith.truncf %24 : vector<8x32xf32> to vector<8x32xbf16>
    %cst_15 = arith.constant dense<0.000000e+00> : vector<8x96xf32>
    %27 = tpu.matmul %26, %25, %cst_15 {dimension_numbers = #tpu.dot_dimension_numbers<[1], [1], [0], [0], [0, 0, 1, 0], [], []>} : vector<8x32xbf16>, vector<96x32xbf16>, vector<8x96xf32> -> vector<8x96xf32>
    %c0_16 = arith.constant 0 : index
    %c0_17 = arith.constant 0 : index
    %28 = vector.load %arg7[%c0_16, %c0_17] : memref<8x96xf32, #tpu.memory_space<vmem>>, vector<8x96xf32>
    %29 = arith.addf %27, %28 : vector<8x96xf32>
    %cst_18 = arith.constant dense<0xFF800000> : vector<8xf32>
    %30 = vector.multi_reduction <maximumf>, %29, %cst_18 [1] : vector<8x96xf32> to vector<8xf32>
    %31 = vector.shape_cast %30 : vector<8xf32> to vector<8x1xf32>
    %32 = vector.broadcast %31 : vector<8x1xf32> to vector<8x96xf32>
    %33 = arith.subf %29, %32 : vector<8x96xf32>
    %34 = math.exp %33 : vector<8x96xf32>
    %cst_19 = arith.constant dense<0.000000e+00> : vector<8xf32>
    %35 = vector.multi_reduction <add>, %34, %cst_19 [1] : vector<8x96xf32> to vector<8xf32>
    %36 = vector.shape_cast %35 : vector<8xf32> to vector<8x1xf32>
    %37 = tpu.reciprocal %36 : vector<8x1xf32> -> vector<8x1xf32>
    %38 = vector.broadcast %37 : vector<8x1xf32> to vector<8x96xf32>
    %39 = arith.mulf %34, %38 : vector<8x96xf32>
    %40 = arith.truncf %39 : vector<8x96xf32> to vector<8x96xbf16>
    %cst_20 = arith.constant dense<0.000000e+00> : vector<8x32xf32>
    %41 = tpu.matmul %40, %25, %cst_20 {dimension_numbers = #tpu.dot_dimension_numbers<[1], [0], [0], [1], [0, 0, 1, 1], [], []>} : vector<8x96xbf16>, vector<96x32xbf16>, vector<8x32xf32> -> vector<8x32xf32>
    %42 = tpu.concatenate %23, %0, %41, %1 in 1 : vector<8x32xf32>, vector<8x32xf32>, vector<8x32xf32>, vector<8x32xf32> -> vector<8x128xf32>
    %43 = arith.truncf %42 : vector<8x128xf32> to vector<8x128xbf16>
    %c0_21 = arith.constant 0 : index
    %c0_22 = arith.constant 0 : index
    %44 = vector.load %arg1[%c0_21, %c0_22] : memref<128x32xbf16, #tpu.memory_space<vmem>>, vector<128x32xbf16>
    %cst_23 = arith.constant dense<0.000000e+00> : vector<8x32xf32>
    %45 = tpu.matmul %43, %44, %cst_23 {dimension_numbers = #tpu.dot_dimension_numbers<[1], [0], [0], [1], [0, 0, 1, 1], [], []>} : vector<8x128xbf16>, vector<128x32xbf16>, vector<8x32xf32> -> vector<8x32xf32>
    %46 = math.tanh %45 : vector<8x32xf32>
    %47 = tpu.concatenate %46, %21, %39 in 1 : vector<8x32xf32>, vector<8x128xf32>, vector<8x96xf32> -> vector<8x256xf32>
    %c0_24 = arith.constant 0 : index
    %c0_25 = arith.constant 0 : index
    %48 = vector.load %arg8[%c0_24, %c0_25] : memref<8x256xf32, #tpu.memory_space<vmem>>, vector<8x256xf32>
    tpu.vector_store %arg8[%c0_24, %c0_25], %47 {strides = array<i32>} : memref<8x256xf32, #tpu.memory_space<vmem>>, vector<8x256xf32>,
    return
  }
}

</mosaic_0001>

<llo_original>
// kernel: tile.14
$region0: #{tile.14}
  %s0 = inlined_call_operand.vmem [shape: pred[8,8,16], index: 0, kind: input, shape index: {}]
  %s1 = inlined_call_operand.vmem [shape: pred[8,128], index: 1, kind: output, shape index: {}]
  $region1: #{tile.14} parent=0
    #allocation0 [shape = 'u8[4096]{0}', space=vmem, size = 0x1000, scoped, tag = 'scoped mem for output reshape']
    #allocation1 [shape = 'u8[32768]{0}', space=vmem, size = 0x8000, scoped, tag = 'scoped mem for input reshape']
    %s3 = ssub.s32 256, 1
    %s4 = sand.u32 %s3, 15
    %p5 = scmp.ne.s32.totalorder %s4, 0
    %s6 = scalar_select %p5, 1, 0
    %s7 = sand.u32 %s3, 240
    %p8 = scmp.ne.s32.totalorder %s7, 0
    %s9 = scalar_select %p8, 2, 0
    %s10 = sor.u32 %s6, %s9
    %s11 = scalar_lea.vmem %s0, 14
    %v12 = vld [vmem:[%s11] sm:%s10]
    %v13 = vunpack.c.0.s8 %v12
    %v14 = vunpack.c.1.s8 %v12
    %v15 = vunpack.c.2.s8 %v12
    %v16 = vunpack.c.3.s8 %v12
    %s17 = scalar_lea.vmem [#allocation1], 56
    %18 = vst [vmem:[%s17] sm:%s3] %v13
    %s19 = sand.u32 %s3, 15
    %p20 = scmp.ne.s32.totalorder %s19, 0
    %s21 = scalar_select %p20, 1, 0
    %s22 = sand.u32 %s3, 240
    %p23 = scmp.ne.s32.totalorder %s22, 0
    %s24 = scalar_select %p23, 2, 0
    %s25 = sor.u32 %s21, %s24
    %s26 = scalar_lea.vmem %s0, 12
    %v27 = vld [vmem:[%s26] sm:%s25]
    %v28 = vunpack.c.0.s8 %v27
    %v29 = vunpack.c.1.s8 %v27
    %v30 = vunpack.c.2.s8 %v27
    %v31 = vunpack.c.3.s8 %v27
    %s32 = scalar_lea.vmem [#allocation1], 48
    %33 = vst [vmem:[%s32] sm:%s3] %v28
    %s34 = sand.u32 %s3, 15
    %p35 = scmp.ne.s32.totalorder %s34, 0
    %s36 = scalar_select %p35, 1, 0
    %s37 = sand.u32 %s3, 240
    %p38 = scmp.ne.s32.totalorder %s37, 0
    %s39 = scalar_select %p38, 2, 0
    %s40 = sor.u32 %s36, %s39
    %s41 = scalar_lea.vmem %s0, 10
    %v42 = vld [vmem:[%s41] sm:%s40]
    %v43 = vunpack.c.0.s8 %v42
    %v44 = vunpack.c.1.s8 %v42
    %v45 = vunpack.c.2.s8 %v42
    %v46 = vunpack.c.3.s8 %v42
    %s47 = scalar_lea.vmem [#allocation1], 40
    %48 = vst [vmem:[%s47] sm:%s3] %v43
    %s49 = sand.u32 %s3, 15
    %p50 = scmp.ne.s32.totalorder %s49, 0
    %s51 = scalar_select %p50, 1, 0
    %s52 = sand.u32 %s3, 240
    %p53 = scmp.ne.s32.totalorder %s52, 0
    %s54 = scalar_select %p53, 2, 0
    %s55 = sor.u32 %s51, %s54
    %s56 = scalar_lea.vmem %s0, 8
    %v57 = vld [vmem:[%s56] sm:%s55]
    %v58 = vunpack.c.0.s8 %v57
    %v59 = vunpack.c.1.s8 %v57
    %v60 = vunpack.c.2.s8 %v57
    %v61 = vunpack.c.3.s8 %v57
    %s62 = scalar_lea.vmem [#allocation1], 32
    %63 = vst [vmem:[%s62] sm:%s3] %v58
    %s64 = sand.u32 %s3, 15
    %p65 = scmp.ne.s32.totalorder %s64, 0
    %s66 = scalar_select %p65, 1, 0
    %s67 = sand.u32 %s3, 240
    %p68 = scmp.ne.s32.totalorder %s67, 0
    %s69 = scalar_select %p68, 2, 0
    %s70 = sor.u32 %s66, %s69
    %s71 = scalar_lea.vmem %s0, 6
    %v72 = vld [vmem:[%s71] sm:%s70]
    %v73 = vunpack.c.0.s8 %v72
    %v74 = vunpack.c.1.s8 %v72
    %v75 = vunpack.c.2.s8 %v72
    %v76 = vunpack.c.3.s8 %v72
    %s77 = scalar_lea.vmem [#allocation1], 24
    %78 = vst [vmem:[%s77] sm:%s3] %v73
    %s79 = sand.u32 %s3, 15
    %p80 = scmp.ne.s32.totalorder %s79, 0
    %s81 = scalar_select %p80, 1, 0
    %s82 = sand.u32 %s3, 240
    %p83 = scmp.ne.s32.totalorder %s82, 0
    %s84 = scalar_select %p83, 2, 0
    %s85 = sor.u32 %s81, %s84
    %s86 = scalar_lea.vmem %s0, 4
    %v87 = vld [vmem:[%s86] sm:%s85]
    %v88 = vunpack.c.0.s8 %v87
    %v89 = vunpack.c.1.s8 %v87
    %v90 = vunpack.c.2.s8 %v87
    %v91 = vunpack.c.3.s8 %v87
    %s92 = scalar_lea.vmem [#allocation1], 16
    %93 = vst [vmem:[%s92] sm:%s3] %v88
    %s94 = sand.u32 %s3, 15
    %p95 = scmp.ne.s32.totalorder %s94, 0
    %s96 = scalar_select %p95, 1, 0
    %s97 = sand.u32 %s3, 240
    %p98 = scmp.ne.s32.totalorder %s97, 0
    %s99 = scalar_select %p98, 2, 0
    %s100 = sor.u32 %s96, %s99
    %s101 = scalar_lea.vmem %s0, 2
    %v102 = vld [vmem:[%s101] sm:%s100]
    %v103 = vunpack.c.0.s8 %v102
    %v104 = vunpack.c.1.s8 %v102
    %v105 = vunpack.c.2.s8 %v102
    %v106 = vunpack.c.3.s8 %v102
    %s107 = scalar_lea.vmem [#allocation1], 8
    %108 = vst [vmem:[%s107] sm:%s3] %v103
    %s109 = sand.u32 %s3, 15
    %p110 = scmp.ne.s32.totalorder %s109, 0
    %s111 = scalar_select %p110, 1, 0
    %s112 = sand.u32 %s3, 240
    %p113 = scmp.ne.s32.totalorder %s112, 0
    %s114 = scalar_select %p113, 2, 0
    %s115 = sor.u32 %s111, %s114
    %v116 = vld [vmem:[%s0] sm:%s115]
    %v117 = vunpack.c.0.s8 %v116
    %v118 = vunpack.c.1.s8 %v116
    %v119 = vunpack.c.2.s8 %v116
    %v120 = vunpack.c.3.s8 %v116
    %121 = vst [vmem:[#allocation1] sm:%s3] %v117
    %v122 = vld [vmem:[#allocation1] ss:$8 sm:$0xf]
    %v123 = vld [vmem:[#allocation1] ss:$8 sm:$0xf0]
    %vm124 = vcmask 1047556
    %v125 = vsel %vm124, %v123, %v122
    %vm126 = vcmask 130048
    %127 = vst.msk [vmem:[#allocation0] sm:$0xff] %vm126, %v125
    %s128 = scalar_lea.vmem [#allocation1], 7
    %v129 = vld [vmem:[%s128] ss:$8 sm:$0xf]
    %s130 = scalar_lea.vmem [#allocation1], 7
    %v131 = vld [vmem:[%s130] ss:$8 sm:$0xf0]
    %vm132 = vcmask 1047556
    %v133 = vsel %vm132, %v131, %v129
    %134 = vrot.lane.b32.xlu0 %v133, 112
    %v135 = vpop.permute.xlu0 %134
    %vm136 = vcmask 1048448
    %137 = vst.msk [vmem:[#allocation0] sm:$0xff] %vm136, %v135
    %s138 = scalar_lea.vmem [#allocation1], 6
    %v139 = vld [vmem:[%s138] ss:$8 sm:$0xf]
    %s140 = scalar_lea.vmem [#allocation1], 6
    %v141 = vld [vmem:[%s140] ss:$8 sm:$0xf0]
    %vm142 = vcmask 1047556
    %v143 = vsel %vm142, %v141, %v139
    %144 = vrot.lane.b32.xlu0 %v143, 96
    %v145 = vpop.permute.xlu0 %144
    %vm146 = vcmask 917248
    %147 = vst.msk [vmem:[#allocation0] sm:$0xff] %vm146, %v145
    %s148 = scalar_lea.vmem [#allocation1], 5
    %v149 = vld [vmem:[%s148] ss:$8 sm:$0xf]
    %s150 = scalar_lea.vmem [#allocation1], 5
    %v151 = vld [vmem:[%s150] ss:$8 sm:$0xf0]
    %vm152 = vcmask 1047556
    %v153 = vsel %vm152, %v151, %v149
    %154 = vrot.lane.b32.xlu0 %v153, 80
    %v155 = vpop.permute.xlu0 %154
    %vm156 = vcmask 786048
    %157 = vst.msk [vmem:[#allocation0] sm:$0xff] %vm156, %v155
    %s158 = scalar_lea.vmem [#allocation1], 4
    %v159 = vld [vmem:[%s158] ss:$8 sm:$0xf]
    %s160 = scalar_lea.vmem [#allocation1], 4
    %v161 = vld [vmem:[%s160] ss:$8 sm:$0xf0]
    %vm162 = vcmask 1047556
    %v163 = vsel %vm162, %v161, %v159
    %164 = vrot.lane.b32.xlu0 %v163, 64
    %v165 = vpop.permute.xlu0 %164
    %vm166 = vcmask 654848
    %167 = vst.msk [vmem:[#allocation0] sm:$0xff] %vm166, %v165
    %s168 = scalar_lea.vmem [#allocation1], 3
    %v169 = vld [vmem:[%s168] ss:$8 sm:$0xf]
    %s170 = scalar_lea.vmem [#allocation1], 3
    %v171 = vld [vmem:[%s170] ss:$8 sm:$0xf0]
    %vm172 = vcmask 1047556
    %v173 = vsel %vm172, %v171, %v169
    %174 = vrot.lane.b32.xlu0 %v173, 48
    %v175 = vpop.permute.xlu0 %174
    %vm176 = vcmask 523648
    %177 = vst.msk [vmem:[#allocation0] sm:$0xff] %vm176, %v175
    %s178 = scalar_lea.vmem [#allocation1], 2
    %v179 = vld [vmem:[%s178] ss:$8 sm:$0xf]
    %s180 = scalar_lea.vmem [#allocation1], 2
    %v181 = vld [vmem:[%s180] ss:$8 sm:$0xf0]
    %vm182 = vcmask 1047556
    %v183 = vsel %vm182, %v181, %v179
    %184 = vrot.lane.b32.xlu0 %v183, 32
    %v185 = vpop.permute.xlu0 %184
    %vm186 = vcmask 392448
    %187 = vst.msk [vmem:[#allocation0] sm:$0xff] %vm186, %v185
    %s188 = scalar_lea.vmem [#allocation1], 1
    %v189 = vld [vmem:[%s188] ss:$8 sm:$0xf]
    %s190 = scalar_lea.vmem [#allocation1], 1
    %v191 = vld [vmem:[%s190] ss:$8 sm:$0xf0]
    %vm192 = vcmask 1047556
    %v193 = vsel %vm192, %v191, %v189
    %194 = vrot.lane.b32.xlu0 %v193, 16
    %v195 = vpop.permute.xlu0 %194
    %vm196 = vcmask 261248
    %197 = vst.msk [vmem:[#allocation0] sm:$0xff] %vm196, %v195
    %s199 = ssub.s32 256, 1
    %v200 = vld [vmem:[#allocation0] sm:%s199]
    %s202 = ssub.s32 4, 1
    %v203 = vpack.c.b16 0, %v200
    %v204 = vpack.c.b8 0, %v203
    %205 = vst [vmem:[%s1] sm:%s202] %v204

// kernel: tile.19
$region0: #{tile.19}
  %s0 = inlined_call_operand.vmem [shape: pred[8,8,12], index: 0, kind: input, shape index: {}]
  %s1 = inlined_call_operand.vmem [shape: pred[8,96], index: 1, kind: output, shape index: {}]
  $region1: #{tile.19} parent=0
    #allocation0 [shape = 'u8[4096]{0}', space=vmem, size = 0x1000, scoped, tag = 'scoped mem for output reshape']
    #allocation1 [shape = 'u8[32768]{0}', space=vmem, size = 0x8000, scoped, tag = 'scoped mem for input reshape']
    %s3 = ssub.s32 256, 1
    %s4 = sand.u32 %s3, 15
    %p5 = scmp.ne.s32.totalorder %s4, 0
    %s6 = scalar_select %p5, 1, 0
    %s7 = sand.u32 %s3, 240
    %p8 = scmp.ne.s32.totalorder %s7, 0
    %s9 = scalar_select %p8, 2, 0
    %s10 = sor.u32 %s6, %s9
    %s11 = scalar_lea.vmem %s0, 14
    %v12 = vld [vmem:[%s11] sm:%s10]
    %v13 = vunpack.c.0.s8 %v12
    %v14 = vunpack.c.1.s8 %v12
    %v15 = vunpack.c.2.s8 %v12
    %v16 = vunpack.c.3.s8 %v12
    %s17 = scalar_lea.vmem [#allocation1], 56
    %18 = vst [vmem:[%s17] sm:%s3] %v13
    %s19 = sand.u32 %s3, 15
    %p20 = scmp.ne.s32.totalorder %s19, 0
    %s21 = scalar_select %p20, 1, 0
    %s22 = sand.u32 %s3, 240
    %p23 = scmp.ne.s32.totalorder %s22, 0
    %s24 = scalar_select %p23, 2, 0
    %s25 = sor.u32 %s21, %s24
    %s26 = scalar_lea.vmem %s0, 12
    %v27 = vld [vmem:[%s26] sm:%s25]
    %v28 = vunpack.c.0.s8 %v27
    %v29 = vunpack.c.1.s8 %v27
    %v30 = vunpack.c.2.s8 %v27
    %v31 = vunpack.c.3.s8 %v27
    %s32 = scalar_lea.vmem [#allocation1], 48
    %33 = vst [vmem:[%s32] sm:%s3] %v28
    %s34 = sand.u32 %s3, 15
    %p35 = scmp.ne.s32.totalorder %s34, 0
    %s36 = scalar_select %p35, 1, 0
    %s37 = sand.u32 %s3, 240
    %p38 = scmp.ne.s32.totalorder %s37, 0
    %s39 = scalar_select %p38, 2, 0
    %s40 = sor.u32 %s36, %s39
    %s41 = scalar_lea.vmem %s0, 10
    %v42 = vld [vmem:[%s41] sm:%s40]
    %v43 = vunpack.c.0.s8 %v42
    %v44 = vunpack.c.1.s8 %v42
    %v45 = vunpack.c.2.s8 %v42
    %v46 = vunpack.c.3.s8 %v42
    %s47 = scalar_lea.vmem [#allocation1], 40
    %48 = vst [vmem:[%s47] sm:%s3] %v43
    %s49 = sand.u32 %s3, 15
    %p50 = scmp.ne.s32.totalorder %s49, 0
    %s51 = scalar_select %p50, 1, 0
    %s52 = sand.u32 %s3, 240
    %p53 = scmp.ne.s32.totalorder %s52, 0
    %s54 = scalar_select %p53, 2, 0
    %s55 = sor.u32 %s51, %s54
    %s56 = scalar_lea.vmem %s0, 8
    %v57 = vld [vmem:[%s56] sm:%s55]
    %v58 = vunpack.c.0.s8 %v57
    %v59 = vunpack.c.1.s8 %v57
    %v60 = vunpack.c.2.s8 %v57
    %v61 = vunpack.c.3.s8 %v57
    %s62 = scalar_lea.vmem [#allocation1], 32
    %63 = vst [vmem:[%s62] sm:%s3] %v58
    %s64 = sand.u32 %s3, 15
    %p65 = scmp.ne.s32.totalorder %s64, 0
    %s66 = scalar_select %p65, 1, 0
    %s67 = sand.u32 %s3, 240
    %p68 = scmp.ne.s32.totalorder %s67, 0
    %s69 = scalar_select %p68, 2, 0
    %s70 = sor.u32 %s66, %s69
    %s71 = scalar_lea.vmem %s0, 6
    %v72 = vld [vmem:[%s71] sm:%s70]
    %v73 = vunpack.c.0.s8 %v72
    %v74 = vunpack.c.1.s8 %v72
    %v75 = vunpack.c.2.s8 %v72
    %v76 = vunpack.c.3.s8 %v72
    %s77 = scalar_lea.vmem [#allocation1], 24
    %78 = vst [vmem:[%s77] sm:%s3] %v73
    %s79 = sand.u32 %s3, 15
    %p80 = scmp.ne.s32.totalorder %s79, 0
    %s81 = scalar_select %p80, 1, 0
    %s82 = sand.u32 %s3, 240
    %p83 = scmp.ne.s32.totalorder %s82, 0
    %s84 = scalar_select %p83, 2, 0
    %s85 = sor.u32 %s81, %s84
    %s86 = scalar_lea.vmem %s0, 4
    %v87 = vld [vmem:[%s86] sm:%s85]
    %v88 = vunpack.c.0.s8 %v87
    %v89 = vunpack.c.1.s8 %v87
    %v90 = vunpack.c.2.s8 %v87
    %v91 = vunpack.c.3.s8 %v87
    %s92 = scalar_lea.vmem [#allocation1], 16
    %93 = vst [vmem:[%s92] sm:%s3] %v88
    %s94 = sand.u32 %s3, 15
    %p95 = scmp.ne.s32.totalorder %s94, 0
    %s96 = scalar_select %p95, 1, 0
    %s97 = sand.u32 %s3, 240
    %p98 = scmp.ne.s32.totalorder %s97, 0
    %s99 = scalar_select %p98, 2, 0
    %s100 = sor.u32 %s96, %s99
    %s101 = scalar_lea.vmem %s0, 2
    %v102 = vld [vmem:[%s101] sm:%s100]
    %v103 = vunpack.c.0.s8 %v102
    %v104 = vunpack.c.1.s8 %v102
    %v105 = vunpack.c.2.s8 %v102
    %v106 = vunpack.c.3.s8 %v102
    %s107 = scalar_lea.vmem [#allocation1], 8
    %108 = vst [vmem:[%s107] sm:%s3] %v103
    %s109 = sand.u32 %s3, 15
    %p110 = scmp.ne.s32.totalorder %s109, 0
    %s111 = scalar_select %p110, 1, 0
    %s112 = sand.u32 %s3, 240
    %p113 = scmp.ne.s32.totalorder %s112, 0
    %s114 = scalar_select %p113, 2, 0
    %s115 = sor.u32 %s111, %s114
    %v116 = vld [vmem:[%s0] sm:%s115]
    %v117 = vunpack.c.0.s8 %v116
    %v118 = vunpack.c.1.s8 %v116
    %v119 = vunpack.c.2.s8 %v116
    %v120 = vunpack.c.3.s8 %v116
    %121 = vst [vmem:[#allocation1] sm:%s3] %v117
    %v122 = vld [vmem:[#allocation1] ss:$8 sm:$0xf]
    %v123 = vld [vmem:[#allocation1] ss:$8 sm:$0xf0]
    %vm124 = vcmask 1047556
    %v125 = vsel %vm124, %v123, %v122
    %vm126 = vcmask 97280
    %127 = vst.msk [vmem:[#allocation0] sm:$0xff] %vm126, %v125
    %s128 = scalar_lea.vmem [#allocation1], 7
    %v129 = vld [vmem:[%s128] ss:$8 sm:$0xf]
    %s130 = scalar_lea.vmem [#allocation1], 7
    %v131 = vld [vmem:[%s130] ss:$8 sm:$0xf0]
    %vm132 = vcmask 1047556
    %v133 = vsel %vm132, %v131, %v129
    %134 = vrot.lane.b32.xlu0 %v133, 84
    %v135 = vpop.permute.xlu0 %134
    %vm136 = vcmask 786080
    %137 = vst.msk [vmem:[#allocation0] sm:$0xff] %vm136, %v135
    %s138 = scalar_lea.vmem [#allocation1], 6
    %v139 = vld [vmem:[%s138] ss:$8 sm:$0xf]
    %s140 = scalar_lea.vmem [#allocation1], 6
    %v141 = vld [vmem:[%s140] ss:$8 sm:$0xf0]
    %vm142 = vcmask 1047556
    %v143 = vsel %vm142, %v141, %v139
    %144 = vrot.lane.b32.xlu0 %v143, 72
    %v145 = vpop.permute.xlu0 %144
    %vm146 = vcmask 687680
    %147 = vst.msk [vmem:[#allocation0] sm:$0xff] %vm146, %v145
    %s148 = scalar_lea.vmem [#allocation1], 5
    %v149 = vld [vmem:[%s148] ss:$8 sm:$0xf]
    %s150 = scalar_lea.vmem [#allocation1], 5
    %v151 = vld [vmem:[%s150] ss:$8 sm:$0xf0]
    %vm152 = vcmask 1047556
    %v153 = vsel %vm152, %v151, %v149
    %154 = vrot.lane.b32.xlu0 %v153, 60
    %v155 = vpop.permute.xlu0 %154
    %vm156 = vcmask 589280
    %157 = vst.msk [vmem:[#allocation0] sm:$0xff] %vm156, %v155
    %s158 = scalar_lea.vmem [#allocation1], 4
    %v159 = vld [vmem:[%s158] ss:$8 sm:$0xf]
    %s160 = scalar_lea.vmem [#allocation1], 4
    %v161 = vld [vmem:[%s160] ss:$8 sm:$0xf0]
    %vm162 = vcmask 1047556
    %v163 = vsel %vm162, %v161, %v159
    %164 = vrot.lane.b32.xlu0 %v163, 48
    %v165 = vpop.permute.xlu0 %164
    %vm166 = vcmask 490880
    %167 = vst.msk [vmem:[#allocation0] sm:$0xff] %vm166, %v165
    %s168 = scalar_lea.vmem [#allocation1], 3
    %v169 = vld [vmem:[%s168] ss:$8 sm:$0xf]
    %s170 = scalar_lea.vmem [#allocation1], 3
    %v171 = vld [vmem:[%s170] ss:$8 sm:$0xf0]
    %vm172 = vcmask 1047556
    %v173 = vsel %vm172, %v171, %v169
    %174 = vrot.lane.b32.xlu0 %v173, 36
    %v175 = vpop.permute.xlu0 %174
    %vm176 = vcmask 392480
    %177 = vst.msk [vmem:[#allocation0] sm:$0xff] %vm176, %v175
    %s178 = scalar_lea.vmem [#allocation1], 2
    %v179 = vld [vmem:[%s178] ss:$8 sm:$0xf]
    %s180 = scalar_lea.vmem [#allocation1], 2
    %v181 = vld [vmem:[%s180] ss:$8 sm:$0xf0]
    %vm182 = vcmask 1047556
    %v183 = vsel %vm182, %v181, %v179
    %184 = vrot.lane.b32.xlu0 %v183, 24
    %v185 = vpop.permute.xlu0 %184
    %vm186 = vcmask 294080
    %187 = vst.msk [vmem:[#allocation0] sm:$0xff] %vm186, %v185
    %s188 = scalar_lea.vmem [#allocation1], 1
    %v189 = vld [vmem:[%s188] ss:$8 sm:$0xf]
    %s190 = scalar_lea.vmem [#allocation1], 1
    %v191 = vld [vmem:[%s190] ss:$8 sm:$0xf0]
    %vm192 = vcmask 1047556
    %v193 = vsel %vm192, %v191, %v189
    %194 = vrot.lane.b32.xlu0 %v193, 12
    %v195 = vpop.permute.xlu0 %194
    %vm196 = vcmask 195680
    %197 = vst.msk [vmem:[#allocation0] sm:$0xff] %vm196, %v195
    %s199 = ssub.s32 256, 1
    %v200 = vld [vmem:[#allocation0] sm:%s199]
    %s202 = ssub.s32 4, 1
    %v203 = vpack.c.b16 0, %v200
    %v204 = vpack.c.b8 0, %v203
    %205 = vst [vmem:[%s1] sm:%s202] %v204

// kernel: hybrid_attention.1
$region0: #{hybrid_attention.1}
  #allocation0 [shape = 'u32[]', space=smem, size = 0x4, offset = 0x4, fixed_abs, tag = 'smem constant byte address 0x4 - core index']
  #allocation1 [shape = 'u32[72,128]{1,0:T(1,128)}', space=vmem, size = 0x9000, scoped, tag = 'internal scratch']
  %s0 = inlined_call_operand.vmem [shape: bf16[32,32], index: 0, kind: input, shape index: {}]
  %s1 = inlined_call_operand.vmem [shape: bf16[128,32], index: 1, kind: input, shape index: {}]
  %s2 = inlined_call_operand.vmem [shape: f32[8,32], index: 2, kind: input, shape index: {}]
  %s3 = inlined_call_operand.vmem [shape: f32[8,32], index: 3, kind: input, shape index: {}]
  %s4 = inlined_call_operand.vmem [shape: bf16[128,32], index: 4, kind: input, shape index: {}]
  %s5 = inlined_call_operand.vmem [shape: f32[8,128], index: 5, kind: input, shape index: {}]
  %s6 = inlined_call_operand.vmem [shape: bf16[96,32], index: 6, kind: input, shape index: {}]
  %s7 = inlined_call_operand.vmem [shape: f32[8,96], index: 7, kind: input, shape index: {}]
  %s8 = inlined_call_operand.vmem [shape: f32[8,256], index: 8, kind: output, shape index: {}]
  %s9 = sld [smem:[#allocation0]]
  $region42: #{hybrid_attention.1} parent=0
    _
  %s11 = ssub.s32 1, %s9
  %s12 = scalar_select 0, %s11, %s9
  // Predicated region
  $region2: #{hybrid_attention.1} parent=0 // pred_check
    _
  $region3: #{hybrid_attention.1} parent=0 // pred_check_branch
    %14 = sbr.rel (0) target = $region5
  $region4: #{hybrid_attention.1} parent=0 // pred_region
    _
  $region5: #{hybrid_attention.1} parent=0 // pred_fallthru
    _
  // Predicated region
  $region6: #{hybrid_attention.1} parent=0 // pred_check
    _
  $region7: #{hybrid_attention.1} parent=0 // pred_check_branch
    %16 = sbr.rel (0) target = $region9
  $region8: #{hybrid_attention.1} parent=0 // pred_region
    _
  $region9: #{hybrid_attention.1} parent=0 // pred_fallthru
    _
  // Predicated region
  $region10: #{hybrid_attention.1} parent=0 // pred_check
    _
  $region11: #{hybrid_attention.1} parent=0 // pred_check_branch
    %18 = sbr.rel (0) target = $region13
  $region12: #{hybrid_attention.1} parent=0 // pred_region
    _
  $region13: #{hybrid_attention.1} parent=0 // pred_fallthru
    _
  // Predicated region
  $region14: #{hybrid_attention.1} parent=0 // pred_check
    _
  $region15: #{hybrid_attention.1} parent=0 // pred_check_branch
    %20 = sbr.rel (0) target = $region17
  $region16: #{hybrid_attention.1} parent=0 // pred_region
    _
  $region17: #{hybrid_attention.1} parent=0 // pred_fallthru
    _
  // Predicated region
  $region18: #{hybrid_attention.1} parent=0 // pred_check
    _
  $region19: #{hybrid_attention.1} parent=0 // pred_check_branch
    %22 = sbr.rel (0) target = $region21
  $region20: #{hybrid_attention.1} parent=0 // pred_region
    _
  $region21: #{hybrid_attention.1} parent=0 // pred_fallthru
    _
  // Predicated region
  $region22: #{hybrid_attention.1} parent=0 // pred_check
    _
  $region23: #{hybrid_attention.1} parent=0 // pred_check_branch
    %24 = sbr.rel (0) target = $region25
  $region24: #{hybrid_attention.1} parent=0 // pred_region
    _
  $region25: #{hybrid_attention.1} parent=0 // pred_fallthru
    _
  // Predicated region
  $region26: #{hybrid_attention.1} parent=0 // pred_check
    _
  $region27: #{hybrid_attention.1} parent=0 // pred_check_branch
    %26 = sbr.rel (0) target = $region29
  $region28: #{hybrid_attention.1} parent=0 // pred_region
    _
  $region29: #{hybrid_attention.1} parent=0 // pred_fallthru
    _
  // Predicated region
  $region30: #{hybrid_attention.1} parent=0 // pred_check
    _
  $region31: #{hybrid_attention.1} parent=0 // pred_check_branch
    %28 = sbr.rel (0) target = $region33
  $region32: #{hybrid_attention.1} parent=0 // pred_region
    _
  $region33: #{hybrid_attention.1} parent=0 // pred_fallthru
    _
  %v30 = vld [vmem:[%s2] sm:$0xff]
  %v31 = vld [vmem:[%s3] sm:$0xff]
  %v32 = vpack.c.bf16 %v31, %v30
  %v33 = vld [vmem:[%s0] sm:$0xf]
  %v34 = vld [vmem:[%s0 + $0x4] sm:$0xf]
  %v35 = vld [vmem:[%s0 + $0x8] sm:$0xf]
  %v36 = vld [vmem:[%s0 + $0xc] sm:$0xf]
  %v41 = vunpack.c.l.b16 %v33
  %v42 = vunpack.c.l.b16 %v34
  %v43 = vunpack.c.l.b16 %v35
  %v44 = vunpack.c.l.b16 %v36
  %v45 = vpack.c.b16 %v42, %v41
  %v46 = vpack.c.b16 %v44, %v43
  %vm49 = vcmask 261120
  %v51 = vsel %vm49, %v32, 0
  %53 = vmatpush.bf16.msra.mxu0 0
  %54 = vmatpush.bf16.msra.mxu0 0
  %55 = vmatpush.bf16.msra.mxu0 0
  %56 = vmatpush.bf16.msra.mxu0 0
  %57 = vmatpush.bf16.msra.mxu0 0
  %58 = vmatpush.bf16.msra.mxu0 0
  %59 = vmatpush.bf16.msra.mxu0 %v46
  %60 = vmatpush.bf16.msra.mxu0 %v45
  %61 = vmatmul.bf16.gmra.mxu0 %v51
  %v62 = vpop.f32.mrf.mxu0
  %v63 = vadd.f32 0.0, %v62
  %v64 = vpop.f32.mrf.mxu0
  %v65 = vadd.f32 0.0, %v64
  %66 = vdwg.mxu0
  %v67 = vld [vmem:[%s4] sm:$0xf]
  %v68 = vld [vmem:[%s4 + $0x4] sm:$0xf]
  %v69 = vld [vmem:[%s4 + $0x8] sm:$0xf]
  %v70 = vld [vmem:[%s4 + $0xc] sm:$0xf]
  %v71 = vld [vmem:[%s4 + $0x10] sm:$0xf]
  %v72 = vld [vmem:[%s4 + $0x14] sm:$0xf]
  %v73 = vld [vmem:[%s4 + $0x18] sm:$0xf]
  %v74 = vld [vmem:[%s4 + $0x1c] sm:$0xf]
  %v75 = vld [vmem:[%s4 + $0x20] sm:$0xf]
  %v76 = vld [vmem:[%s4 + $0x24] sm:$0xf]
  %v77 = vld [vmem:[%s4 + $0x28] sm:$0xf]
  %v78 = vld [vmem:[%s4 + $0x2c] sm:$0xf]
  %v79 = vld [vmem:[%s4 + $0x30] sm:$0xf]
  %v80 = vld [vmem:[%s4 + $0x34] sm:$0xf]
  %v81 = vld [vmem:[%s4 + $0x38] sm:$0xf]
  %v82 = vld [vmem:[%s4 + $0x3c] sm:$0xf]
  %v83 = vpack.c.bf16 %v63, %v63
  %v84 = vld [vmem:[%s5] sm:$0xff]
  %v101 = vunpack.c.l.b16 %v67
  %v102 = vunpack.c.l.b16 %v68
  %v103 = vunpack.c.l.b16 %v69
  %v104 = vunpack.c.l.b16 %v70
  %v105 = vunpack.c.l.b16 %v71
  %v106 = vunpack.c.l.b16 %v72
  %v107 = vunpack.c.l.b16 %v73
  %v108 = vunpack.c.l.b16 %v74
  %v109 = vunpack.c.l.b16 %v75
  %v110 = vunpack.c.l.b16 %v76
  %v111 = vunpack.c.l.b16 %v77
  %v112 = vunpack.c.l.b16 %v78
  %v113 = vunpack.c.l.b16 %v79
  %v114 = vunpack.c.l.b16 %v80
  %v115 = vunpack.c.l.b16 %v81
  %v116 = vunpack.c.l.b16 %v82
  %v117 = vpack.c.b16 %v102, %v101
  %v118 = vpack.c.b16 %v104, %v103
  %v119 = vpack.c.b16 %v106, %v105
  %v120 = vpack.c.b16 %v108, %v107
  %v121 = vpack.c.b16 %v110, %v109
  %v122 = vpack.c.b16 %v112, %v111
  %v123 = vpack.c.b16 %v114, %v113
  %v124 = vpack.c.b16 %v116, %v115
  %v126 = vsel %vm49, %v83, 0
  %v129 = vsel %vm49, %v117, 0
  %v132 = vsel %vm49, %v118, 0
  %v135 = vsel %vm49, %v119, 0
  %v138 = vsel %vm49, %v120, 0
  %v141 = vsel %vm49, %v121, 0
  %v144 = vsel %vm49, %v122, 0
  %v147 = vsel %vm49, %v123, 0
  %v150 = vsel %vm49, %v124, 0
  %152 = vmatpush.bf16.xpose.msra.mxu0 %v150
  %153 = vmatpush.bf16.xpose.msra.mxu0 %v147
  %154 = vmatpush.bf16.xpose.msra.mxu0 %v144
  %155 = vmatpush.bf16.xpose.msra.mxu0 %v141
  %156 = vmatpush.bf16.xpose.msra.mxu0 %v138
  %157 = vmatpush.bf16.xpose.msra.mxu0 %v135
  %158 = vmatpush.bf16.xpose.msra.mxu0 %v132
  %159 = vmatpush.bf16.xpose.msra.mxu0 %v129
  %160 = vmatmul.bf16.gmra.mxu0 %v126
  %v161 = vpop.f32.mrf.mxu0
  %v162 = vadd.f32 %v84, %v161
  %v163 = vpop.f32.mrf.mxu0
  %164 = vdwg.mxu0
  %165 = vmax.xlane.f32.xlu0 %v162
  %v166 = vpop.xlane.xlu0 %165
  %v167 = vsub.f32 %v162, %v166
  %v168 = vmul.f32 %v167, 1.442695
  %v169 = vpow.pop %v168
  %170 = vadd.xlane.f32.xlu0 %v169
  %v171 = vpop.xlane.xlu0 %170
  %v172 = vrcp.pop %v171
  %v173 = vmul.f32 %v171, %v172
  %v174 = vsub.f32 1.0, %v173
  %v175 = vmul.f32 %v172, %v174
  %v176 = vadd.f32 %v172, %v175
  %vm177 = vweird.f32 %v171
  %vm178 = vweird.f32 %v172
  %vm179 = vmor %vm177, %vm178
  %v180 = vsel %vm179, %v172, %v176
  %v181 = vand.u32 2147483647, %v171
  %vm182 = vcmp.eq.f32.partialorder %v181, 8.507059e+37
  %v183 = vand.u32 %v171, 2147483648
  %v184 = vor.u32 1.1754944e-38, %v183
  %v185 = vsel %vm182, %v184, %v180
  %v186 = vmul.f32 %v169, %v185
  %v187 = vpack.c.bf16 %v186, %v186
  %196 = vmatpush.bf16.msra.mxu0 %v124
  %197 = vmatpush.bf16.msra.mxu0 %v123
  %198 = vmatpush.bf16.msra.mxu0 %v122
  %199 = vmatpush.bf16.msra.mxu0 %v121
  %200 = vmatpush.bf16.msra.mxu0 %v120
  %201 = vmatpush.bf16.msra.mxu0 %v119
  %202 = vmatpush.bf16.msra.mxu0 %v118
  %203 = vmatpush.bf16.msra.mxu0 %v117
  %204 = vmatmul.bf16.gmra.mxu0 %v187
  %v205 = vpop.f32.mrf.mxu0
  %v206 = vadd.f32 0.0, %v205
  %v207 = vpop.f32.mrf.mxu0
  %208 = vdwg.mxu0
  %v209 = vld [vmem:[%s6] sm:$0xf]
  %v210 = vld [vmem:[%s6 + $0x4] sm:$0xf]
  %v211 = vld [vmem:[%s6 + $0x8] sm:$0xf]
  %v212 = vld [vmem:[%s6 + $0xc] sm:$0xf]
  %v213 = vld [vmem:[%s6 + $0x10] sm:$0xf]
  %v214 = vld [vmem:[%s6 + $0x14] sm:$0xf]
  %v215 = vld [vmem:[%s6 + $0x18] sm:$0xf]
  %v216 = vld [vmem:[%s6 + $0x1c] sm:$0xf]
  %v217 = vld [vmem:[%s6 + $0x20] sm:$0xf]
  %v218 = vld [vmem:[%s6 + $0x24] sm:$0xf]
  %v219 = vld [vmem:[%s6 + $0x28] sm:$0xf]
  %v220 = vld [vmem:[%s6 + $0x2c] sm:$0xf]
  %v221 = vpack.c.bf16 %v65, %v65
  %v222 = vld [vmem:[%s7] sm:$0xff]
  %v235 = vunpack.c.l.b16 %v209
  %v236 = vunpack.c.l.b16 %v210
  %v237 = vunpack.c.l.b16 %v211
  %v238 = vunpack.c.l.b16 %v212
  %v239 = vunpack.c.l.b16 %v213
  %v240 = vunpack.c.l.b16 %v214
  %v241 = vunpack.c.l.b16 %v215
  %v242 = vunpack.c.l.b16 %v216
  %v243 = vunpack.c.l.b16 %v217
  %v244 = vunpack.c.l.b16 %v218
  %v245 = vunpack.c.l.b16 %v219
  %v246 = vunpack.c.l.b16 %v220
  %v247 = vpack.c.b16 %v236, %v235
  %v248 = vpack.c.b16 %v238, %v237
  %v249 = vpack.c.b16 %v240, %v239
  %v250 = vpack.c.b16 %v242, %v241
  %v251 = vpack.c.b16 %v244, %v243
  %v252 = vpack.c.b16 %v246, %v245
  %v254 = vsel %vm49, %v221, 0
  %v257 = vsel %vm49, %v247, 0
  %v260 = vsel %vm49, %v248, 0
  %v263 = vsel %vm49, %v249, 0
  %v266 = vsel %vm49, %v250, 0
  %v269 = vsel %vm49, %v251, 0
  %v272 = vsel %vm49, %v252, 0
  %274 = vmatpush.bf16.xpose.msra.mxu0 0
  %275 = vmatpush.bf16.xpose.msra.mxu0 0
  %276 = vmatpush.bf16.xpose.msra.mxu0 %v272
  %277 = vmatpush.bf16.xpose.msra.mxu0 %v269
  %278 = vmatpush.bf16.xpose.msra.mxu0 %v266
  %279 = vmatpush.bf16.xpose.msra.mxu0 %v263
  %280 = vmatpush.bf16.xpose.msra.mxu0 %v260
  %281 = vmatpush.bf16.xpose.msra.mxu0 %v257
  %282 = vmatmul.bf16.gmra.mxu0 %v254
  %v283 = vpop.f32.mrf.mxu0
  %v284 = vadd.f32 %v222, %v283
  %v285 = vpop.f32.mrf.mxu0
  %286 = vdwg.mxu0
  %vm287 = vcmask 785408
  %v288 = vsel %vm287, %v284, -inf
  %289 = vmax.xlane.f32.xlu0 %v288
  %v290 = vpop.xlane.xlu0 %289
  %v291 = vsub.f32 %v284, %v290
  %v292 = vmul.f32 %v291, 1.442695
  %v293 = vpow.pop %v292
  %v294 = vsel %vm287, %v293, 0.0
  %295 = vadd.xlane.f32.xlu0 %v294
  %v296 = vpop.xlane.xlu0 %295
  %v297 = vrcp.pop %v296
  %v298 = vmul.f32 %v296, %v297
  %v299 = vsub.f32 1.0, %v298
  %v300 = vmul.f32 %v297, %v299
  %v301 = vadd.f32 %v297, %v300
  %vm302 = vweird.f32 %v296
  %vm303 = vweird.f32 %v297
  %vm304 = vmor %vm302, %vm303
  %v305 = vsel %vm304, %v297, %v301
  %v306 = vand.u32 2147483647, %v296
  %vm307 = vcmp.eq.f32.partialorder %v306, 8.507059e+37
  %v308 = vand.u32 %v296, 2147483648
  %v309 = vor.u32 1.1754944e-38, %v308
  %v310 = vsel %vm307, %v309, %v305
  %v311 = vmul.f32 %v293, %v310
  %v312 = vpack.c.bf16 %v311, %v311
  %v320 = vsel %vm287, %v312, 0
  %322 = vmatpush.bf16.msra.mxu0 0
  %323 = vmatpush.bf16.msra.mxu0 0
  %324 = vmatpush.bf16.msra.mxu0 %v252
  %325 = vmatpush.bf16.msra.mxu0 %v251
  %326 = vmatpush.bf16.msra.mxu0 %v250
  %327 = vmatpush.bf16.msra.mxu0 %v249
  %328 = vmatpush.bf16.msra.mxu0 %v248
  %329 = vmatpush.bf16.msra.mxu0 %v247
  %330 = vmatmul.bf16.gmra.mxu0 %v320
  %v331 = vpop.f32.mrf.mxu0
  %v332 = vadd.f32 0.0, %v331
  %v333 = vpop.f32.mrf.mxu0
  %334 = vdwg.mxu0
  %336 = vrot.lane.b32.xlu0 %v30, 32
  %v337 = vpop.permute.xlu0 %336
  %340 = vrot.lane.b32.xlu0 %v332, 64
  %v341 = vpop.permute.xlu0 %340
  %344 = vrot.lane.b32.xlu0 %v31, 96
  %v345 = vpop.permute.xlu0 %344
  %v347 = vsel %vm49, %v206, %v337
  %vm348 = vcmask 523264
  %v349 = vsel %vm348, %v347, %v341
  %v350 = vsel %vm287, %v349, %v345
  %v351 = vpack.c.bf16 %v350, %v350
  %v352 = vld [vmem:[%s1] sm:$0xf]
  %v353 = vld [vmem:[%s1 + $0x4] sm:$0xf]
  %v354 = vld [vmem:[%s1 + $0x8] sm:$0xf]
  %v355 = vld [vmem:[%s1 + $0xc] sm:$0xf]
  %v356 = vld [vmem:[%s1 + $0x10] sm:$0xf]
  %v357 = vld [vmem:[%s1 + $0x14] sm:$0xf]
  %v358 = vld [vmem:[%s1 + $0x18] sm:$0xf]
  %v359 = vld [vmem:[%s1 + $0x1c] sm:$0xf]
  %v360 = vld [vmem:[%s1 + $0x20] sm:$0xf]
  %v361 = vld [vmem:[%s1 + $0x24] sm:$0xf]
  %v362 = vld [vmem:[%s1 + $0x28] sm:$0xf]
  %v363 = vld [vmem:[%s1 + $0x2c] sm:$0xf]
  %v364 = vld [vmem:[%s1 + $0x30] sm:$0xf]
  %v365 = vld [vmem:[%s1 + $0x34] sm:$0xf]
  %v366 = vld [vmem:[%s1 + $0x38] sm:$0xf]
  %v367 = vld [vmem:[%s1 + $0x3c] sm:$0xf]
  %v384 = vunpack.c.l.b16 %v352
  %v385 = vunpack.c.l.b16 %v353
  %v386 = vunpack.c.l.b16 %v354
  %v387 = vunpack.c.l.b16 %v355
  %v388 = vunpack.c.l.b16 %v356
  %v389 = vunpack.c.l.b16 %v357
  %v390 = vunpack.c.l.b16 %v358
  %v391 = vunpack.c.l.b16 %v359
  %v392 = vunpack.c.l.b16 %v360
  %v393 = vunpack.c.l.b16 %v361
  %v394 = vunpack.c.l.b16 %v362
  %v395 = vunpack.c.l.b16 %v363
  %v396 = vunpack.c.l.b16 %v364
  %v397 = vunpack.c.l.b16 %v365
  %v398 = vunpack.c.l.b16 %v366
  %v399 = vunpack.c.l.b16 %v367
  %v400 = vpack.c.b16 %v385, %v384
  %v401 = vpack.c.b16 %v387, %v386
  %v402 = vpack.c.b16 %v389, %v388
  %v403 = vpack.c.b16 %v391, %v390
  %v404 = vpack.c.b16 %v393, %v392
  %v405 = vpack.c.b16 %v395, %v394
  %v406 = vpack.c.b16 %v397, %v396
  %v407 = vpack.c.b16 %v399, %v398
  %416 = vmatpush.bf16.msra.mxu0 %v407
  %417 = vmatpush.bf16.msra.mxu0 %v406
  %418 = vmatpush.bf16.msra.mxu0 %v405
  %419 = vmatpush.bf16.msra.mxu0 %v404
  %420 = vmatpush.bf16.msra.mxu0 %v403
  %421 = vmatpush.bf16.msra.mxu0 %v402
  %422 = vmatpush.bf16.msra.mxu0 %v401
  %423 = vmatpush.bf16.msra.mxu0 %v400
  %424 = vmatmul.bf16.gmra.mxu0 %v351
  %v425 = vpop.f32.mrf.mxu0
  %v426 = vadd.f32 0.0, %v425
  %v427 = vpop.f32.mrf.mxu0
  %428 = vdwg.mxu0
  %v429 = vtanh.pop %v426
  %431 = vrot.lane.b32.xlu0 %v186, 32
  %v432 = vpop.permute.xlu0 %431
  %435 = vrot.lane.b32.xlu0 %v311, 32
  %v436 = vpop.permute.xlu0 %435
  %v438 = vsel %vm49, %v429, %v432
  %v439 = vsel %vm49, %v432, %v436
  %440 = vst [vmem:[%s8] sm:$0xff] %v438
  %441 = vst [vmem:[%s8 + $0x8] sm:$0xff] %v439
  // Predicated region
  $region34: #{hybrid_attention.1} parent=0 // pred_check
    _
  $region35: #{hybrid_attention.1} parent=0 // pred_check_branch
    %443 = sbr.rel (0) target = $region37
  $region36: #{hybrid_attention.1} parent=0 // pred_region
    _
  $region37: #{hybrid_attention.1} parent=0 // pred_fallthru
    _
  // Predicated region
  $region38: #{hybrid_attention.1} parent=0 // pred_check
    _
  $region39: #{hybrid_attention.1} parent=0 // pred_check_branch
    %445 = sbr.rel (0) target = $region41
  $region40: #{hybrid_attention.1} parent=0 // pred_region
    _
  $region41: #{hybrid_attention.1} parent=0 // pred_fallthru
    _

</llo_original>
